<compile_context>
chip_gen: v7x
topology: tpu7x:2x2x1
jax: 0.10.0
libtpu: 0.0.40
codegen_flags: <defaults>
</compile_context>

<pallas_src>
import functools
import numpy as np
import jax
import jax.numpy as jnp
from jax import lax
from jax.experimental import pallas as pl
from jax.experimental.pallas import tpu as pltpu

HEADS = 4
NEG_SLOPE = 0.2
LN_EPS = 1e-5
MAX_TILE_D = 256                       # destination-row tile per grid step
_VMEM_LIMIT = 48 * 1024 * 1024         # headroom below v7x's 64 MiB per-TC VMEM


def _round_up(x, m):
    return ((x + m - 1) // m) * m


def _tile_rows(n):
    """Destination-row tile size + padded row count satisfying the (8,128) rule."""
    if n <= MAX_TILE_D:
        return n, n                    # block == full dim -> always legal
    return MAX_TILE_D, _round_up(n, MAX_TILE_D)


# ----------------------------- Pallas kernels ------------------------------ #

def _gat_msg_kernel(xs_ref, w_ref, wa_src_t_ref, wa_dst_ref, xd_ref, adj_ref,
                    out_ref, *, heads, head_dim):
    """Per-edge-type GAT messages for one tile of destination rows.

    Emits the lane-dense per-head slab [tile_d, heads*head_dim]; head mean, bias,
    HeteroConv mean and ReLU+LayerNorm are fused in the epilogue kernel.
    """
    xs = xs_ref[...]                                       # [Ns, fin] f32 (resident)
    w = w_ref[...]                                         # [fin, H*D] bf16 (resident)
    hs = jnp.dot(xs.astype(jnp.bfloat16), w,
                 preferred_element_type=jnp.float32)       # [Ns, H*D]
    hs_b = hs.astype(jnp.bfloat16)

    # attention logits with a_src / a_dst pre-folded into the weights
    alpha_s = lax.dot_general(wa_src_t_ref[...], xs,
                              (((1,), (1,)), ((), ())),
                              preferred_element_type=jnp.float32)    # [H, Ns]
    xd = xd_ref[...]                                       # [tile_d, fin]
    alpha_d = jnp.dot(xd, wa_dst_ref[...],
                      preferred_element_type=jnp.float32)  # [tile_d, H]

    mask = adj_ref[...].astype(jnp.float32) > 0.5          # int8 adjacency -> bool

    outs = []
    for h in range(heads):                                 # static unroll; temporaries per head
        e = alpha_d[:, h:h + 1] + alpha_s[h:h + 1, :]      # [tile_d, Ns]
        e = jnp.where(e >= 0, e, NEG_SLOPE * e)            # LeakyReLU(0.2), f32 VPU
        e = jnp.where(mask, e, -1e30)
        m = jnp.max(e, axis=-1, keepdims=True)
        p = jnp.where(mask, jnp.exp(e - m), 0.0)           # unnormalized attention
        denom = jnp.sum(p, axis=-1, keepdims=True)
        inv = pl.reciprocal(jnp.maximum(denom, 1e-16), approx=True)  # EUP slot
        msg = jnp.dot(p.astype(jnp.bfloat16),
                      hs_b[:, h * head_dim:(h + 1) * head_dim],
                      preferred_element_type=jnp.float32)  # [tile_d, D]
        outs.append(msg * inv)                             # rows w/o neighbors -> 0
    out_ref[...] = jnp.concatenate(outs, axis=-1)          # lane-dense [tile_d, H*D]


def _epilogue_kernel(msg_ref, bias_ref, g_ref, b_ref, o_ref,
                     *, heads, head_dim, n_et, apply_relu_ln):
    """Fused HeteroConv mean over edge types + head mean + bias (+ ReLU + LayerNorm)."""
    s = msg_ref[0]                                         # [tile_d, H*D]
    for e in range(1, n_et):                               # sum over edge types
        s = s + msg_ref[e]
    acc = s[:, 0:head_dim]
    for h in range(1, heads):                              # head mean (concat=False)
        acc = acc + s[:, h * head_dim:(h + 1) * head_dim]
    x = acc * (1.0 / float(heads * n_et)) + bias_ref[...]
    if apply_relu_ln:
        x = jnp.maximum(x, 0.0)
        mu = jnp.mean(x, axis=-1, keepdims=True)
        xc = x - mu
        var = jnp.mean(xc * xc, axis=-1, keepdims=True)
        x = xc * lax.rsqrt(var + LN_EPS) * g_ref[...] + b_ref[...]
    o_ref[...] = x


# ------------------------------- wrappers ----------------------------------- #

def gat_messages(xs, xd_pad, adj_pad, params, *, tile_d):
    ns, fin = xs.shape
    nd_pad = xd_pad.shape[0]
    hd = params["w_bf16"].shape[-1]
    head_dim = hd // HEADS
    kernel = functools.partial(_gat_msg_kernel, heads=HEADS, head_dim=head_dim)
    return pl.pallas_call(
        kernel,
        out_shape=jax.ShapeDtypeStruct((nd_pad, hd), jnp.float32),
        grid=(nd_pad // tile_d,),
        in_specs=[
            pl.BlockSpec((ns, fin), lambda i: (0, 0)),        # xs       (resident)
            pl.BlockSpec((fin, hd), lambda i: (0, 0)),        # W  bf16  (resident)
            pl.BlockSpec((HEADS, fin), lambda i: (0, 0)),     # W·a_src  (resident)
            pl.BlockSpec((fin, HEADS), lambda i: (0, 0)),     # W·a_dst  (resident)
            pl.BlockSpec((tile_d, fin), lambda i: (i, 0)),    # xd tile
            pl.BlockSpec((tile_d, ns), lambda i: (i, 0)),     # int8 adjacency tile
        ],
        out_specs=pl.BlockSpec((tile_d, hd), lambda i: (i, 0)),
        compiler_params=pltpu.CompilerParams(
            dimension_semantics=("parallel",),
            vmem_limit_bytes=_VMEM_LIMIT),
    )(xs, params["w_bf16"], params["wa_src_t"], params["wa_dst"], xd_pad, adj_pad)


def hetero_epilogue(msgs, bias_mean, gamma, beta, *, tile_d, apply_relu_ln):
    n_et, nd_pad, hd = msgs.shape
    d = bias_mean.shape[-1]
    kernel = functools.partial(_epilogue_kernel, heads=HEADS, head_dim=d,
                               n_et=n_et, apply_relu_ln=apply_relu_ln)
    return pl.pallas_call(
        kernel,
        out_shape=jax.ShapeDtypeStruct((nd_pad, d), jnp.float32),
        grid=(nd_pad // tile_d,),
        in_specs=[
            pl.BlockSpec((n_et, tile_d, hd), lambda i: (0, i, 0)),
            pl.BlockSpec((1, d), lambda i: (0, 0)),
            pl.BlockSpec((1, d), lambda i: (0, 0)),
            pl.BlockSpec((1, d), lambda i: (0, 0)),
        ],
        out_specs=pl.BlockSpec((tile_d, d), lambda i: (i, 0)),
        compiler_params=pltpu.CompilerParams(
            dimension_semantics=("parallel",),
            vmem_limit_bytes=_VMEM_LIMIT),
    )(msgs, bias_mean, gamma, beta)


# ------------------------------- glue (JAX) -------------------------------- #

def build_adj(edge_index, n_src, n_dst_pad):
    """Densify an edge list into an int8 adjacency [n_dst_pad, n_src]."""
    adj = jnp.zeros((n_dst_pad, n_src), jnp.int8)
    ei = np.asarray(edge_index)
    if ei.shape[1] > 0:
        adj = adj.at[ei[1], ei[0]].set(jnp.int8(1))
    return adj


def _pad_rows(x, n_pad):
    n = x.shape[0]
    if n_pad == n:
        return x
    return jnp.pad(x, ((0, n_pad - n), (0, 0)))


def trim_to_layer(layer, neighbor_mask_node, neighbor_mask_edge, x, edge_index):
    """Prefix-trim nodes / edges whose sampling hop exceeds `layer` (hops ascending)."""
    new_x = {}
    for ntype, feats in x.items():
        keep = int(np.sum(np.asarray(neighbor_mask_node[ntype]) <= layer))
        keep = min(keep, feats.shape[0])
        new_x[ntype] = feats[:keep]
    new_ei = {}
    for etype, ei in edge_index.items():
        emask = np.asarray(neighbor_mask_edge[etype])
        new_ei[etype] = np.asarray(ei)[:, emask <= layer]
    return new_x, new_ei, None


def _glorot(key, shape):
    fan_in, fan_out = shape[0], shape[-1]
    lim = float(np.sqrt(6.0 / (fan_in + fan_out)))
    return jax.random.uniform(key, shape, jnp.float32, -lim, lim)


class HierarchicalHeteroGraphConvPallas:
    def __init__(self, edge_types, input_channels, hidden_channels, num_layers,
                 dropout=0.5, seed=0):
        self.num_layers = num_layers
        self.hidden_channels = hidden_channels
        self.edge_types = [tuple(e) for e in edge_types]
        key = jax.random.PRNGKey(seed)
        self.conv_params = []      # per layer: {edge_type: params}
        self.ln_params = []        # per intermediate layer: (gamma, beta)
        for layer in range(num_layers):
            fin = input_channels if layer == 0 else hidden_channels
            layer_p = {}
            for e_idx, et in enumerate(self.edge_types):
                k = jax.random.fold_in(jax.random.fold_in(key, layer), e_idx)
                kw, ks, kd = jax.random.split(k, 3)
                w = _glorot(kw, (fin, HEADS * hidden_channels))
                a_src = _glorot(ks, (HEADS, hidden_channels))
                a_dst = _glorot(kd, (HEADS, hidden_channels))
                w3 = w.reshape(fin, HEADS, hidden_channels)
                layer_p[et] = {
                    # a_src / a_dst folded into W (offline) -> no dst projection in kernel
                    "wa_src_t": jnp.einsum("fhd,hd->hf", w3, a_src),   # [H, fin]
                    "wa_dst": jnp.einsum("fhd,hd->fh", w3, a_dst),     # [fin, H]
                    "w_bf16": w.astype(jnp.bfloat16),                  # MXU operand
                    "bias": jnp.zeros((1, hidden_channels), jnp.float32),
                }
            self.conv_params.append(layer_p)
            if layer < num_layers - 1:
                self.ln_params.append((jnp.ones((1, hidden_channels), jnp.float32),
                                       jnp.zeros((1, hidden_channels), jnp.float32)))

    def _hetero_conv(self, layer_params, x_dict, edge_index_dict, gamma, beta,
                     apply_relu_ln):
        per_dst_msgs, per_dst_bias, tile_info = {}, {}, {}
        for et, ei in edge_index_dict.items():
            src_t, _, dst_t = et
            xs, xd = x_dict[src_t], x_dict[dst_t]
            nd = xd.shape[0]
            tile_d, nd_pad = _tile_rows(nd)
            tile_info[dst_t] = (tile_d, nd_pad, nd)
            adj = build_adj(ei, xs.shape[0], nd_pad)
            msgs = gat_messages(xs, _pad_rows(xd, nd_pad), adj,
                                layer_params[et], tile_d=tile_d)
            per_dst_msgs.setdefault(dst_t, []).append(msgs)
            per_dst_bias.setdefault(dst_t, []).append(layer_params[et]["bias"])
        out = {}
        for dst_t, msg_list in per_dst_msgs.items():
            tile_d, nd_pad, nd = tile_info[dst_t]
            msgs = jnp.stack(msg_list, axis=0)                         # [E, nd_pad, H*D]
            # TODO(synk): HeteroConv 'mean' here averages over every edge type present in
            #             edge_index_dict for this dst type (even if its trimmed edge list
            #             is empty), matching the previous implementation.
            bias_mean = jnp.mean(jnp.stack(per_dst_bias[dst_t], axis=0), axis=0)
            y = hetero_epilogue(msgs, bias_mean, gamma, beta,
                                tile_d=tile_d, apply_relu_ln=apply_relu_ln)
            out[dst_t] = y[:nd]
        return out

    def forward(self, x_dict, edge_index_dict, neighbor_mask_node, neighbor_mask_edge):
        ones = jnp.ones((1, self.hidden_channels), jnp.float32)
        zeros = jnp.zeros((1, self.hidden_channels), jnp.float32)
        for i in range(self.num_layers - 1):
            x_dict, edge_index_dict, _ = trim_to_layer(
                self.num_layers - i, neighbor_mask_node, neighbor_mask_edge,
                x_dict, edge_index_dict)
            gamma, beta = self.ln_params[i]
            # conv + head-mean + hetero-mean + ReLU + LayerNorm fused; dropout = identity
            x_dict = self._hetero_conv(self.conv_params[i], x_dict, edge_index_dict,
                                       gamma, beta, apply_relu_ln=True)
        x_dict, edge_index_dict, _ = trim_to_layer(
            1, neighbor_mask_node, neighbor_mask_edge, x_dict, edge_index_dict)
        x_dict = self._hetero_conv(self.conv_params[-1], x_dict, edge_index_dict,
                                   ones, zeros, apply_relu_ln=False)
        return x_dict


# --------------------------------- demo ------------------------------------ #

if __name__ == "__main__":
    rng = np.random.default_rng(0)
    key = jax.random.PRNGKey(0)

    input_channels, hidden_channels, num_layers = 16, 32, 2
    edge_types = [("note", "onset", "note"),
                  ("note", "belongs", "beat"),
                  ("beat", "next", "beat")]

    # node counts and sampling-hop masks (sorted ascending -> prefix trimming valid)
    node_masks = {
        "note": np.array([0] * 16 + [1] * 8 + [2] * 8, dtype=np.int32),   # 32 notes
        "beat": np.array([0] * 8 + [1] * 4 + [2] * 4, dtype=np.int32),    # 16 beats
    }
    n_nodes = {k: v.shape[0] for k, v in node_masks.items()}

    kx1, kx2 = jax.random.split(key)
    x_dict = {
        "note": jax.random.normal(kx1, (n_nodes["note"], input_channels), jnp.float32),
        "beat": jax.random.normal(kx2, (n_nodes["beat"], input_channels), jnp.float32),
    }

    edge_index_dict, edge_masks = {}, {}
    n_edges = {("note", "onset", "note"): 96,
               ("note", "belongs", "beat"): 64,
               ("beat", "next", "beat"): 32}
    for et, ne in n_edges.items():
        src_t, _, dst_t = et
        src = rng.integers(0, n_nodes[src_t], size=ne)
        dst = rng.integers(0, n_nodes[dst_t], size=ne)
        edge_index_dict[et] = np.stack([src, dst]).astype(np.int32)
        edge_masks[et] = np.maximum(node_masks[src_t][src], node_masks[dst_t][dst])

    model = HierarchicalHeteroGraphConvPallas(
        edge_types, input_channels, hidden_channels, num_layers, dropout=0.5, seed=0)

    out = model.forward(x_dict, edge_index_dict, node_masks, edge_masks)
    for v in out.values():
        jax.block_until_ready(v)
    assert all(v.shape[-1] == hidden_channels for v in out.values())
    assert all(bool(jnp.all(jnp.isfinite(v))) for v in out.values())
    print("KERNEL_OK")
</pallas_src>

<mosaic_0001>
module attributes {stable_mosaic.version = 11 : i64} {
  func.func @_gat_msg_kernel(%arg0: i32, %arg1: memref<32x16xf32, #tpu.memory_space<vmem>>, %arg2: memref<16x128xbf16, #tpu.memory_space<vmem>>, %arg3: memref<4x16xf32, #tpu.memory_space<vmem>>, %arg4: memref<16x4xf32, #tpu.memory_space<vmem>>, %arg5: memref<32x16xf32, #tpu.memory_space<vmem>>, %arg6: memref<32x32xi8, #tpu.memory_space<vmem>>, %arg7: memref<32x128xf32, #tpu.memory_space<vmem>>) attributes {dimension_semantics = [#tpu.dimension_semantics<parallel>], iteration_bounds = array<i64: 1>, scalar_prefetch = 0 : i64, scratch_operands = 0 : i64, tpu.core_type = #tpu.core_type<tc>, window_params = [{pipeline_mode = #tpu.pipeline_mode<synchronous>, transform_indices = @transform_0, window_bounds = array<i64: 32, 16>}, {pipeline_mode = #tpu.pipeline_mode<synchronous>, transform_indices = @transform_1, window_bounds = array<i64: 16, 128>}, {pipeline_mode = #tpu.pipeline_mode<synchronous>, transform_indices = @transform_2, window_bounds = array<i64: 4, 16>}, {pipeline_mode = #tpu.pipeline_mode<synchronous>, transform_indices = @transform_3, window_bounds = array<i64: 16, 4>}, {transform_indices = @transform_4, window_bounds = array<i64: 32, 16>}, {transform_indices = @transform_5, window_bounds = array<i64: 32, 32>}, {transform_indices = @transform_6, window_bounds = array<i64: 32, 128>}]} {
    %c0 = arith.constant 0 : index
    %c0_0 = arith.constant 0 : index
    %0 = vector.load %arg1[%c0, %c0_0] : memref<32x16xf32, #tpu.memory_space<vmem>>, vector<32x16xf32>
    %c0_1 = arith.constant 0 : index
    %c0_2 = arith.constant 0 : index
    %1 = vector.load %arg2[%c0_1, %c0_2] : memref<16x128xbf16, #tpu.memory_space<vmem>>, vector<16x128xbf16>
    %2 = arith.truncf %0 : vector<32x16xf32> to vector<32x16xbf16>
    %cst = arith.constant dense<0.000000e+00> : vector<32x128xf32>
    %3 = tpu.matmul %2, %1, %cst {dimension_numbers = #tpu.dot_dimension_numbers<[1], [0], [0], [1], [0, 0, 1, 1], [], []>} : vector<32x16xbf16>, vector<16x128xbf16>, vector<32x128xf32> -> vector<32x128xf32>
    %4 = arith.truncf %3 : vector<32x128xf32> to vector<32x128xbf16>
    %c0_3 = arith.constant 0 : index
    %c0_4 = arith.constant 0 : index
    %5 = vector.load %arg3[%c0_3, %c0_4] : memref<4x16xf32, #tpu.memory_space<vmem>>, vector<4x16xf32>
    %cst_5 = arith.constant dense<0.000000e+00> : vector<4x32xf32>
    %6 = tpu.matmul %5, %0, %cst_5 {dimension_numbers = #tpu.dot_dimension_numbers<[1], [1], [0], [0], [0, 0, 1, 0], [], []>} : vector<4x16xf32>, vector<32x16xf32>, vector<4x32xf32> -> vector<4x32xf32>
    %c0_6 = arith.constant 0 : index
    %c0_7 = arith.constant 0 : index
    %7 = vector.load %arg5[%c0_6, %c0_7] : memref<32x16xf32, #tpu.memory_space<vmem>>, vector<32x16xf32>
    %c0_8 = arith.constant 0 : index
    %c0_9 = arith.constant 0 : index
    %8 = vector.load %arg4[%c0_8, %c0_9] : memref<16x4xf32, #tpu.memory_space<vmem>>, vector<16x4xf32>
    %cst_10 = arith.constant dense<0.000000e+00> : vector<32x4xf32>
    %9 = tpu.matmul %7, %8, %cst_10 {dimension_numbers = #tpu.dot_dimension_numbers<[1], [0], [0], [1], [0, 0, 1, 1], [], []>} : vector<32x16xf32>, vector<16x4xf32>, vector<32x4xf32> -> vector<32x4xf32>
    %c0_11 = arith.constant 0 : index
    %c0_12 = arith.constant 0 : index
    %10 = vector.load %arg6[%c0_11, %c0_12] : memref<32x32xi8, #tpu.memory_space<vmem>>, vector<32x32xi8>
    %11 = arith.sitofp %10 : vector<32x32xi8> to vector<32x32xf32>
    %cst_13 = arith.constant 5.000000e-01 : f32
    %12 = vector.broadcast %cst_13 : f32 to vector<32x32xf32>
    %13 = arith.cmpf ogt, %11, %12 : vector<32x32xf32>
    %14 = vector.extract_strided_slice %9 {offsets = [0, 0], sizes = [32, 1], strides = [1, 1]} : vector<32x4xf32> to vector<32x1xf32>
    %15 = vector.extract_strided_slice %6 {offsets = [0, 0], sizes = [1, 32], strides = [1, 1]} : vector<4x32xf32> to vector<1x32xf32>
    %16 = vector.broadcast %14 : vector<32x1xf32> to vector<32x32xf32>
    %17 = vector.broadcast %15 : vector<1x32xf32> to vector<32x32xf32>
    %18 = arith.addf %16, %17 : vector<32x32xf32>
    %cst_14 = arith.constant 0.000000e+00 : f32
    %19 = vector.broadcast %cst_14 : f32 to vector<32x32xf32>
    %20 = arith.cmpf oge, %18, %19 : vector<32x32xf32>
    %cst_15 = arith.constant 2.000000e-01 : f32
    %21 = vector.broadcast %cst_15 : f32 to vector<32x32xf32>
    %22 = arith.mulf %21, %18 : vector<32x32xf32>
    %23 = arith.select %20, %18, %22 : vector<32x32xi1>, vector<32x32xf32>
    %cst_16 = arith.constant -1.000000e+30 : f32
    %24 = vector.broadcast %cst_16 : f32 to vector<32x32xf32>
    %25 = arith.select %13, %23, %24 : vector<32x32xi1>, vector<32x32xf32>
    %cst_17 = arith.constant dense<0xFF800000> : vector<32xf32>
    %26 = vector.multi_reduction <maximumf>, %25, %cst_17 [1] : vector<32x32xf32> to vector<32xf32>
    %27 = vector.shape_cast %26 : vector<32xf32> to vector<32x1xf32>
    %28 = vector.broadcast %27 : vector<32x1xf32> to vector<32x32xf32>
    %29 = arith.subf %25, %28 : vector<32x32xf32>
    %30 = math.exp %29 : vector<32x32xf32>
    %cst_18 = arith.constant 0.000000e+00 : f32
    %31 = vector.broadcast %cst_18 : f32 to vector<32x32xf32>
    %32 = arith.select %13, %30, %31 : vector<32x32xi1>, vector<32x32xf32>
    %cst_19 = arith.constant dense<0.000000e+00> : vector<32xf32>
    %33 = vector.multi_reduction <add>, %32, %cst_19 [1] : vector<32x32xf32> to vector<32xf32>
    %34 = vector.shape_cast %33 : vector<32xf32> to vector<32x1xf32>
    %cst_20 = arith.constant 1.000000e-16 : f32
    %35 = vector.broadcast %cst_20 : f32 to vector<32x1xf32>
    %36 = arith.maximumf %34, %35 : vector<32x1xf32>
    %37 = tpu.reciprocal %36 {approx = true} : vector<32x1xf32> -> vector<32x1xf32>
    %38 = arith.truncf %32 : vector<32x32xf32> to vector<32x32xbf16>
    %39 = vector.extract_strided_slice %4 {offsets = [0, 0], sizes = [32, 32], strides = [1, 1]} : vector<32x128xbf16> to vector<32x32xbf16>
    %cst_21 = arith.constant dense<0.000000e+00> : vector<32x32xf32>
    %40 = tpu.matmul %38, %39, %cst_21 {dimension_numbers = #tpu.dot_dimension_numbers<[1], [0], [0], [1], [0, 0, 1, 1], [], []>} : vector<32x32xbf16>, vector<32x32xbf16>, vector<32x32xf32> -> vector<32x32xf32>
    %41 = vector.broadcast %37 : vector<32x1xf32> to vector<32x32xf32>
    %42 = arith.mulf %40, %41 : vector<32x32xf32>
    %43 = vector.extract_strided_slice %9 {offsets = [0, 1], sizes = [32, 1], strides = [1, 1]} : vector<32x4xf32> to vector<32x1xf32>
    %44 = vector.extract_strided_slice %6 {offsets = [1, 0], sizes = [1, 32], strides = [1, 1]} : vector<4x32xf32> to vector<1x32xf32>
    %45 = vector.broadcast %43 : vector<32x1xf32> to vector<32x32xf32>
    %46 = vector.broadcast %44 : vector<1x32xf32> to vector<32x32xf32>
    %47 = arith.addf %45, %46 : vector<32x32xf32>
    %cst_22 = arith.constant 0.000000e+00 : f32
    %48 = vector.broadcast %cst_22 : f32 to vector<32x32xf32>
    %49 = arith.cmpf oge, %47, %48 : vector<32x32xf32>
    %cst_23 = arith.constant 2.000000e-01 : f32
    %50 = vector.broadcast %cst_23 : f32 to vector<32x32xf32>
    %51 = arith.mulf %50, %47 : vector<32x32xf32>
    %52 = arith.select %49, %47, %51 : vector<32x32xi1>, vector<32x32xf32>
    %cst_24 = arith.constant -1.000000e+30 : f32
    %53 = vector.broadcast %cst_24 : f32 to vector<32x32xf32>
    %54 = arith.select %13, %52, %53 : vector<32x32xi1>, vector<32x32xf32>
    %cst_25 = arith.constant dense<0xFF800000> : vector<32xf32>
    %55 = vector.multi_reduction <maximumf>, %54, %cst_25 [1] : vector<32x32xf32> to vector<32xf32>
    %56 = vector.shape_cast %55 : vector<32xf32> to vector<32x1xf32>
    %57 = vector.broadcast %56 : vector<32x1xf32> to vector<32x32xf32>
    %58 = arith.subf %54, %57 : vector<32x32xf32>
    %59 = math.exp %58 : vector<32x32xf32>
    %cst_26 = arith.constant 0.000000e+00 : f32
    %60 = vector.broadcast %cst_26 : f32 to vector<32x32xf32>
    %61 = arith.select %13, %59, %60 : vector<32x32xi1>, vector<32x32xf32>
    %cst_27 = arith.constant dense<0.000000e+00> : vector<32xf32>
    %62 = vector.multi_reduction <add>, %61, %cst_27 [1] : vector<32x32xf32> to vector<32xf32>
    %63 = vector.shape_cast %62 : vector<32xf32> to vector<32x1xf32>
    %cst_28 = arith.constant 1.000000e-16 : f32
    %64 = vector.broadcast %cst_28 : f32 to vector<32x1xf32>
    %65 = arith.maximumf %63, %64 : vector<32x1xf32>
    %66 = tpu.reciprocal %65 {approx = true} : vector<32x1xf32> -> vector<32x1xf32>
    %67 = arith.truncf %61 : vector<32x32xf32> to vector<32x32xbf16>
    %68 = vector.extract_strided_slice %4 {offsets = [0, 32], sizes = [32, 32], strides = [1, 1]} : vector<32x128xbf16> to vector<32x32xbf16>
    %cst_29 = arith.constant dense<0.000000e+00> : vector<32x32xf32>
    %69 = tpu.matmul %67, %68, %cst_29 {dimension_numbers = #tpu.dot_dimension_numbers<[1], [0], [0], [1], [0, 0, 1, 1], [], []>} : vector<32x32xbf16>, vector<32x32xbf16>, vector<32x32xf32> -> vector<32x32xf32>
    %70 = vector.broadcast %66 : vector<32x1xf32> to vector<32x32xf32>
    %71 = arith.mulf %69, %70 : vector<32x32xf32>
    %72 = vector.extract_strided_slice %9 {offsets = [0, 2], sizes = [32, 1], strides = [1, 1]} : vector<32x4xf32> to vector<32x1xf32>
    %73 = vector.extract_strided_slice %6 {offsets = [2, 0], sizes = [1, 32], strides = [1, 1]} : vector<4x32xf32> to vector<1x32xf32>
    %74 = vector.broadcast %72 : vector<32x1xf32> to vector<32x32xf32>
    %75 = vector.broadcast %73 : vector<1x32xf32> to vector<32x32xf32>
    %76 = arith.addf %74, %75 : vector<32x32xf32>
    %cst_30 = arith.constant 0.000000e+00 : f32
    %77 = vector.broadcast %cst_30 : f32 to vector<32x32xf32>
    %78 = arith.cmpf oge, %76, %77 : vector<32x32xf32>
    %cst_31 = arith.constant 2.000000e-01 : f32
    %79 = vector.broadcast %cst_31 : f32 to vector<32x32xf32>
    %80 = arith.mulf %79, %76 : vector<32x32xf32>
    %81 = arith.select %78, %76, %80 : vector<32x32xi1>, vector<32x32xf32>
    %cst_32 = arith.constant -1.000000e+30 : f32
    %82 = vector.broadcast %cst_32 : f32 to vector<32x32xf32>
    %83 = arith.select %13, %81, %82 : vector<32x32xi1>, vector<32x32xf32>
    %cst_33 = arith.constant dense<0xFF800000> : vector<32xf32>
    %84 = vector.multi_reduction <maximumf>, %83, %cst_33 [1] : vector<32x32xf32> to vector<32xf32>
    %85 = vector.shape_cast %84 : vector<32xf32> to vector<32x1xf32>
    %86 = vector.broadcast %85 : vector<32x1xf32> to vector<32x32xf32>
    %87 = arith.subf %83, %86 : vector<32x32xf32>
    %88 = math.exp %87 : vector<32x32xf32>
    %cst_34 = arith.constant 0.000000e+00 : f32
    %89 = vector.broadcast %cst_34 : f32 to vector<32x32xf32>
    %90 = arith.select %13, %88, %89 : vector<32x32xi1>, vector<32x32xf32>
    %cst_35 = arith.constant dense<0.000000e+00> : vector<32xf32>
    %91 = vector.multi_reduction <add>, %90, %cst_35 [1] : vector<32x32xf32> to vector<32xf32>
    %92 = vector.shape_cast %91 : vector<32xf32> to vector<32x1xf32>
    %cst_36 = arith.constant 1.000000e-16 : f32
    %93 = vector.broadcast %cst_36 : f32 to vector<32x1xf32>
    %94 = arith.maximumf %92, %93 : vector<32x1xf32>
    %95 = tpu.reciprocal %94 {approx = true} : vector<32x1xf32> -> vector<32x1xf32>
    %96 = arith.truncf %90 : vector<32x32xf32> to vector<32x32xbf16>
    %97 = vector.extract_strided_slice %4 {offsets = [0, 64], sizes = [32, 32], strides = [1, 1]} : vector<32x128xbf16> to vector<32x32xbf16>
    %cst_37 = arith.constant dense<0.000000e+00> : vector<32x32xf32>
    %98 = tpu.matmul %96, %97, %cst_37 {dimension_numbers = #tpu.dot_dimension_numbers<[1], [0], [0], [1], [0, 0, 1, 1], [], []>} : vector<32x32xbf16>, vector<32x32xbf16>, vector<32x32xf32> -> vector<32x32xf32>
    %99 = vector.broadcast %95 : vector<32x1xf32> to vector<32x32xf32>
    %100 = arith.mulf %98, %99 : vector<32x32xf32>
    %101 = vector.extract_strided_slice %9 {offsets = [0, 3], sizes = [32, 1], strides = [1, 1]} : vector<32x4xf32> to vector<32x1xf32>
    %102 = vector.extract_strided_slice %6 {offsets = [3, 0], sizes = [1, 32], strides = [1, 1]} : vector<4x32xf32> to vector<1x32xf32>
    %103 = vector.broadcast %101 : vector<32x1xf32> to vector<32x32xf32>
    %104 = vector.broadcast %102 : vector<1x32xf32> to vector<32x32xf32>
    %105 = arith.addf %103, %104 : vector<32x32xf32>
    %cst_38 = arith.constant 0.000000e+00 : f32
    %106 = vector.broadcast %cst_38 : f32 to vector<32x32xf32>
    %107 = arith.cmpf oge, %105, %106 : vector<32x32xf32>
    %cst_39 = arith.constant 2.000000e-01 : f32
    %108 = vector.broadcast %cst_39 : f32 to vector<32x32xf32>
    %109 = arith.mulf %108, %105 : vector<32x32xf32>
    %110 = arith.select %107, %105, %109 : vector<32x32xi1>, vector<32x32xf32>
    %cst_40 = arith.constant -1.000000e+30 : f32
    %111 = vector.broadcast %cst_40 : f32 to vector<32x32xf32>
    %112 = arith.select %13, %110, %111 : vector<32x32xi1>, vector<32x32xf32>
    %cst_41 = arith.constant dense<0xFF800000> : vector<32xf32>
    %113 = vector.multi_reduction <maximumf>, %112, %cst_41 [1] : vector<32x32xf32> to vector<32xf32>
    %114 = vector.shape_cast %113 : vector<32xf32> to vector<32x1xf32>
    %115 = vector.broadcast %114 : vector<32x1xf32> to vector<32x32xf32>
    %116 = arith.subf %112, %115 : vector<32x32xf32>
    %117 = math.exp %116 : vector<32x32xf32>
    %cst_42 = arith.constant 0.000000e+00 : f32
    %118 = vector.broadcast %cst_42 : f32 to vector<32x32xf32>
    %119 = arith.select %13, %117, %118 : vector<32x32xi1>, vector<32x32xf32>
    %cst_43 = arith.constant dense<0.000000e+00> : vector<32xf32>
    %120 = vector.multi_reduction <add>, %119, %cst_43 [1] : vector<32x32xf32> to vector<32xf32>
    %121 = vector.shape_cast %120 : vector<32xf32> to vector<32x1xf32>
    %cst_44 = arith.constant 1.000000e-16 : f32
    %122 = vector.broadcast %cst_44 : f32 to vector<32x1xf32>
    %123 = arith.maximumf %121, %122 : vector<32x1xf32>
    %124 = tpu.reciprocal %123 {approx = true} : vector<32x1xf32> -> vector<32x1xf32>
    %125 = arith.truncf %119 : vector<32x32xf32> to vector<32x32xbf16>
    %126 = vector.extract_strided_slice %4 {offsets = [0, 96], sizes = [32, 32], strides = [1, 1]} : vector<32x128xbf16> to vector<32x32xbf16>
    %cst_45 = arith.constant dense<0.000000e+00> : vector<32x32xf32>
    %127 = tpu.matmul %125, %126, %cst_45 {dimension_numbers = #tpu.dot_dimension_numbers<[1], [0], [0], [1], [0, 0, 1, 1], [], []>} : vector<32x32xbf16>, vector<32x32xbf16>, vector<32x32xf32> -> vector<32x32xf32>
    %128 = vector.broadcast %124 : vector<32x1xf32> to vector<32x32xf32>
    %129 = arith.mulf %127, %128 : vector<32x32xf32>
    %130 = tpu.concatenate %42, %71, %100, %129 in 1 : vector<32x32xf32>, vector<32x32xf32>, vector<32x32xf32>, vector<32x32xf32> -> vector<32x128xf32>
    %c0_46 = arith.constant 0 : index
    %c0_47 = arith.constant 0 : index
    %131 = vector.load %arg7[%c0_46, %c0_47] : memref<32x128xf32, #tpu.memory_space<vmem>>, vector<32x128xf32>
    tpu.vector_store %arg7[%c0_46, %c0_47], %130 {strides = array<i32>} : memref<32x128xf32, #tpu.memory_space<vmem>>, vector<32x128xf32>,
    return
  }
  func.func @transform_0(%arg0: i32) -> (i32, i32) {
    %c0_i32 = arith.constant 0 : i32
    %c0_i32_0 = arith.constant 0 : i32
    %c0_i32_1 = arith.constant 0 : i32
    return %c0_i32, %c0_i32_0 : i32, i32
  }
  func.func @transform_1(%arg0: i32) -> (i32, i32) {
    %c0_i32 = arith.constant 0 : i32
    %c0_i32_0 = arith.constant 0 : i32
    %c0_i32_1 = arith.constant 0 : i32
    return %c0_i32, %c0_i32_0 : i32, i32
  }
  func.func @transform_2(%arg0: i32) -> (i32, i32) {
    %c0_i32 = arith.constant 0 : i32
    %c0_i32_0 = arith.constant 0 : i32
    %c0_i32_1 = arith.constant 0 : i32
    return %c0_i32, %c0_i32_0 : i32, i32
  }
  func.func @transform_3(%arg0: i32) -> (i32, i32) {
    %c0_i32 = arith.constant 0 : i32
    %c0_i32_0 = arith.constant 0 : i32
    %c0_i32_1 = arith.constant 0 : i32
    return %c0_i32, %c0_i32_0 : i32, i32
  }
  func.func @transform_4(%arg0: i32) -> (i32, i32) {
    %c0_i32 = arith.constant 0 : i32
    %c0_i32_0 = arith.constant 0 : i32
    return %arg0, %c0_i32 : i32, i32
  }
  func.func @transform_5(%arg0: i32) -> (i32, i32) {
    %c0_i32 = arith.constant 0 : i32
    %c0_i32_0 = arith.constant 0 : i32
    return %arg0, %c0_i32 : i32, i32
  }
  func.func @transform_6(%arg0: i32) -> (i32, i32) {
    %c0_i32 = arith.constant 0 : i32
    %c0_i32_0 = arith.constant 0 : i32
    return %arg0, %c0_i32 : i32, i32
  }
}

</mosaic_0001>

<llo_original>
// kernel: tpu_custom_call.1
$region0: #{tpu_custom_call.1}
  #allocation0 [shape = 'u32[]', space=smem, size = 0x4, offset = 0x4, fixed_abs, tag = 'smem constant byte address 0x4 - core index']
  #allocation1 [shape = 'u32[144,128]{1,0:T(1,128)}', space=vmem, size = 0x12000, scoped, tag = 'internal scratch']
  %s0 = inlined_call_operand.vmem [shape: f32[32,16], index: 0, kind: input, shape index: {}]
  %s1 = inlined_call_operand.vmem [shape: bf16[16,128], index: 1, kind: input, shape index: {}]
  %s2 = inlined_call_operand.vmem [shape: f32[4,16], index: 2, kind: input, shape index: {}]
  %s3 = inlined_call_operand.vmem [shape: f32[16,4], index: 3, kind: input, shape index: {}]
  %s4 = inlined_call_operand.vmem [shape: f32[32,16], index: 4, kind: input, shape index: {}]
  %s5 = inlined_call_operand.vmem [shape: s8[32,32], index: 5, kind: input, shape index: {}]
  %s6 = inlined_call_operand.hbm [shape: f32[32,128], index: 6, kind: output, shape index: {}]
  %s7 = sld [smem:[#allocation0]]
  $region34: #{tpu_custom_call.1} parent=0
    _
  %s9 = ssub.s32 1, %s7
  %s10 = scalar_select 0, %s9, %s7
  $region1: #{tpu_custom_call.1} parent=0
    #allocation2 [shape = 'u8[16384]{0}', space=vmem, size = 0x4000, scoped, tag = 'output window, operand 0, single buffered']
    #allocation3 [shape = 's32[1]{0}', space=sflag, size = 0x4, scoped, tag = 'scoped memory for tpu_custom_call.1']
    %11 = vsyncpa [#allocation3], 0
    // Predicated region
    $region2: #{tpu_custom_call.1} parent=1 // pred_check
      _
    $region3: #{tpu_custom_call.1} parent=1 // pred_check_branch
      %13 = sbr.rel (0) target = $region5
    $region4: #{tpu_custom_call.1} parent=1 // pred_region
      _
    $region5: #{tpu_custom_call.1} parent=1 // pred_fallthru
      _
    // Predicated region
    $region6: #{tpu_custom_call.1} parent=1 // pred_check
      _
    $region7: #{tpu_custom_call.1} parent=1 // pred_check_branch
      %15 = sbr.rel (0) target = $region9
    $region8: #{tpu_custom_call.1} parent=1 // pred_region
      _
    $region9: #{tpu_custom_call.1} parent=1 // pred_fallthru
      _
    // Predicated region
    $region10: #{tpu_custom_call.1} parent=1 // pred_check
      _
    $region11: #{tpu_custom_call.1} parent=1 // pred_check_branch
      %17 = sbr.rel (0) target = $region13
    $region12: #{tpu_custom_call.1} parent=1 // pred_region
      _
    $region13: #{tpu_custom_call.1} parent=1 // pred_fallthru
      _
    // Predicated region
    $region14: #{tpu_custom_call.1} parent=1 // pred_check
      _
    $region15: #{tpu_custom_call.1} parent=1 // pred_check_branch
      %19 = sbr.rel (0) target = $region17
    $region16: #{tpu_custom_call.1} parent=1 // pred_region
      _
    $region17: #{tpu_custom_call.1} parent=1 // pred_fallthru
      _
    // Predicated region
    $region18: #{tpu_custom_call.1} parent=1 // pred_check
      _
    $region19: #{tpu_custom_call.1} parent=1 // pred_check_branch
      %21 = sbr.rel (0) target = $region21
    $region20: #{tpu_custom_call.1} parent=1 // pred_region
      _
    $region21: #{tpu_custom_call.1} parent=1 // pred_fallthru
      _
    // Predicated region
    $region22: #{tpu_custom_call.1} parent=1 // pred_check
      _
    $region23: #{tpu_custom_call.1} parent=1 // pred_check_branch
      %23 = sbr.rel (0) target = $region25
    $region24: #{tpu_custom_call.1} parent=1 // pred_region
      _
    $region25: #{tpu_custom_call.1} parent=1 // pred_fallthru
      _
    %v25 = vld [vmem:[%s0] sm:$0xff]
    %v26 = vld [vmem:[%s0 + $0x8] sm:$0xff]
    %v27 = vld [vmem:[%s0 + $0x10] sm:$0xff]
    %v28 = vld [vmem:[%s0 + $0x18] sm:$0xff]
    %v29 = vld [vmem:[%s1] sm:$0xf]
    %v30 = vld [vmem:[%s1 + $0x4] sm:$0xf]
    %v31 = vpack.c.bf16 %v26, %v25
    %v32 = vpack.c.bf16 %v28, %v27
    %v35 = vunpack.c.l.b16 %v29
    %v36 = vunpack.c.l.b16 %v30
    %v37 = vpack.c.b16 %v36, %v35
    %vm39 = vcmask 130048
    %v41 = vsel %vm39, %v31, 0
    %v44 = vsel %vm39, %v32, 0
    %46 = vmatprep.subr.bf16.mxu0 0
    %47 = vmatpush1.bf16.msra.mxu0 %v37
    %48 = vmatprep.subr.bf16.mxu0 0
    %49 = vmatpush1.bf16.msra.mxu0 0
    %50 = vmatprep.subr.bf16.mxu0 0
    %51 = vmatpush1.bf16.msra.mxu0 0
    %52 = vmatprep.subr.bf16.mxu0 0
    %53 = vmatpush1.bf16.msra.mxu0 0
    %54 = vmatprep.subr.bf16.mxu0 0
    %55 = vmatpush1.bf16.msra.mxu0 0
    %56 = vmatprep.subr.bf16.mxu0 0
    %57 = vmatpush1.bf16.msra.mxu0 0
    %58 = vmatprep.subr.bf16.mxu0 0
    %59 = vmatpush1.bf16.msra.mxu0 0
    %60 = vmatprep.subr.bf16.mxu0 0
    %61 = vmatpush1.bf16.msra.mxu0 0
    %62 = vmatprep.subr.bf16.mxu0 0
    %63 = vmatpush1.bf16.msra.mxu0 0
    %64 = vmatprep.subr.bf16.mxu0 0
    %65 = vmatpush1.bf16.msra.mxu0 0
    %66 = vmatprep.subr.bf16.mxu0 0
    %67 = vmatpush1.bf16.msra.mxu0 0
    %68 = vmatprep.subr.bf16.mxu0 0
    %69 = vmatpush1.bf16.msra.mxu0 0
    %70 = vmatprep.subr.bf16.mxu0 0
    %71 = vmatpush1.bf16.msra.mxu0 0
    %72 = vmatprep.subr.bf16.mxu0 0
    %73 = vmatpush1.bf16.msra.mxu0 0
    %74 = vmatprep.subr.bf16.mxu0 0
    %75 = vmatpush1.bf16.msra.mxu0 0
    %76 = vmatprep.subr.bf16.mxu0 0
    %77 = vmatpush1.bf16.msra.mxu0 0
    %78 = vmatprep.mubr.bf16.mxu0 0
    %79 = vmatmul.mubr.bf16.gmra.mrb[0].mxu0 %v41
    %v80 = vpop.f32.mrb[0].mxu0
    %v81 = vadd.f32 0.0, %v80
    %v82 = vpop.f32.mrb[0].mxu0
    %v83 = vpop.f32.mrb[0].mxu0
    %v84 = vadd.f32 0.0, %v83
    %v85 = vpop.f32.mrb[0].mxu0
    %86 = vmatprep.mubr.bf16.mxu0 0
    %87 = vmatmul.mubr.bf16.gmra.mrb[0].mxu0 %v44
    %v88 = vpop.f32.mrb[0].mxu0
    %v89 = vadd.f32 0.0, %v88
    %v90 = vpop.f32.mrb[0].mxu0
    %v91 = vpop.f32.mrb[0].mxu0
    %v92 = vadd.f32 0.0, %v91
    %v93 = vpop.f32.mrb[0].mxu0
    %94 = vdwg.mxu0
    %v95 = vpack.c.bf16 %v84, %v81
    %v96 = vpack.c.bf16 %v92, %v89
    %v97 = vld [vmem:[%s2] sm:$0xf]
    %v99 = vsel %vm39, %v97, 0
    %v102 = vsel %vm39, %v25, 0
    %v105 = vsel %vm39, %v26, 0
    %v108 = vsel %vm39, %v27, 0
    %v111 = vsel %vm39, %v28, 0
    %113 = vmatprep.subr.mxu0 0.0
    %114 = vmatpush1.xpose.msra.mxu0 %v102
    %115 = vmatprep.subr.mxu0 0.0
    %116 = vmatpush1.xpose.msra.mxu0 %v105
    %117 = vmatprep.subr.mxu0 0.0
    %118 = vmatpush1.xpose.msra.mxu0 %v108
    %119 = vmatprep.subr.mxu0 0.0
    %120 = vmatpush1.xpose.msra.mxu0 %v111
    %121 = vmatprep.subr.mxu0 0.0
    %122 = vmatpush1.xpose.msra.mxu0 0.0
    %123 = vmatprep.subr.mxu0 0.0
    %124 = vmatpush1.xpose.msra.mxu0 0.0
    %125 = vmatprep.subr.mxu0 0.0
    %126 = vmatpush1.xpose.msra.mxu0 0.0
    %127 = vmatprep.subr.mxu0 0.0
    %128 = vmatpush1.xpose.msra.mxu0 0.0
    %129 = vmatprep.subr.mxu0 0.0
    %130 = vmatpush1.xpose.msra.mxu0 0.0
    %131 = vmatprep.subr.mxu0 0.0
    %132 = vmatpush1.xpose.msra.mxu0 0.0
    %133 = vmatprep.subr.mxu0 0.0
    %134 = vmatpush1.xpose.msra.mxu0 0.0
    %135 = vmatprep.subr.mxu0 0.0
    %136 = vmatpush1.xpose.msra.mxu0 0.0
    %137 = vmatprep.subr.mxu0 0.0
    %138 = vmatpush1.xpose.msra.mxu0 0.0
    %139 = vmatprep.subr.mxu0 0.0
    %140 = vmatpush1.xpose.msra.mxu0 0.0
    %141 = vmatprep.subr.mxu0 0.0
    %142 = vmatpush1.xpose.msra.mxu0 0.0
    %143 = vmatprep.subr.mxu0 0.0
    %144 = vmatpush1.xpose.msra.mxu0 0.0
    %145 = vmatprep.subr.mxu0 0.0
    %146 = vmatpush1.xpose.msra.mxu0 0.0
    %147 = vmatprep.subr.mxu0 0.0
    %148 = vmatpush1.xpose.msra.mxu0 0.0
    %149 = vmatprep.subr.mxu0 0.0
    %150 = vmatpush1.xpose.msra.mxu0 0.0
    %151 = vmatprep.subr.mxu0 0.0
    %152 = vmatpush1.xpose.msra.mxu0 0.0
    %153 = vmatprep.subr.mxu0 0.0
    %154 = vmatpush1.xpose.msra.mxu0 0.0
    %155 = vmatprep.subr.mxu0 0.0
    %156 = vmatpush1.xpose.msra.mxu0 0.0
    %157 = vmatprep.subr.mxu0 0.0
    %158 = vmatpush1.xpose.msra.mxu0 0.0
    %159 = vmatprep.subr.mxu0 0.0
    %160 = vmatpush1.xpose.msra.mxu0 0.0
    %161 = vmatprep.subr.mxu0 0.0
    %162 = vmatpush1.xpose.msra.mxu0 0.0
    %163 = vmatprep.subr.mxu0 0.0
    %164 = vmatpush1.xpose.msra.mxu0 0.0
    %165 = vmatprep.subr.mxu0 0.0
    %166 = vmatpush1.xpose.msra.mxu0 0.0
    %167 = vmatprep.subr.mxu0 0.0
    %168 = vmatpush1.xpose.msra.mxu0 0.0
    %169 = vmatprep.subr.mxu0 0.0
    %170 = vmatpush1.xpose.msra.mxu0 0.0
    %171 = vmatprep.subr.mxu0 0.0
    %172 = vmatpush1.xpose.msra.mxu0 0.0
    %173 = vmatprep.subr.mxu0 0.0
    %174 = vmatpush1.xpose.msra.mxu0 0.0
    %175 = vmatprep.subr.mxu0 0.0
    %176 = vmatpush1.xpose.msra.mxu0 0.0
    %177 = vmatprep.mubr.f32.mxu0 0.0
    %178 = vmatmul.mubr.f32.gmra.mrb[0].mxu0 %v99
    %v179 = vpop.f32.mrb[0].mxu0
    %v180 = vadd.f32 0.0, %v179
    %v181 = vpop.f32.mrb[0].mxu0
    %182 = vdwg.mxu0
    %v183 = vld [vmem:[%s4] sm:$0xff]
    %v184 = vld [vmem:[%s4 + $0x8] sm:$0xff]
    %v185 = vld [vmem:[%s4 + $0x10] sm:$0xff]
    %v186 = vld [vmem:[%s4 + $0x18] sm:$0xff]
    %v187 = vld [vmem:[%s3] sm:$0xff]
    %v188 = vld [vmem:[%s3 + $0x8] sm:$0xff]
    %v190 = vsel %vm39, %v183, 0
    %v193 = vsel %vm39, %v184, 0
    %v196 = vsel %vm39, %v185, 0
    %v199 = vsel %vm39, %v186, 0
    %201 = vmatprep.subr.mxu0 0.0
    %202 = vmatpush1.msra.mxu0 %v187
    %203 = vmatprep.subr.mxu0 0.0
    %204 = vmatpush1.msra.mxu0 %v188
    %205 = vmatprep.subr.mxu0 0.0
    %206 = vmatpush1.msra.mxu0 0.0
    %207 = vmatprep.subr.mxu0 0.0
    %208 = vmatpush1.msra.mxu0 0.0
    %209 = vmatprep.subr.mxu0 0.0
    %210 = vmatpush1.msra.mxu0 0.0
    %211 = vmatprep.subr.mxu0 0.0
    %212 = vmatpush1.msra.mxu0 0.0
    %213 = vmatprep.subr.mxu0 0.0
    %214 = vmatpush1.msra.mxu0 0.0
    %215 = vmatprep.subr.mxu0 0.0
    %216 = vmatpush1.msra.mxu0 0.0
    %217 = vmatprep.subr.mxu0 0.0
    %218 = vmatpush1.msra.mxu0 0.0
    %219 = vmatprep.subr.mxu0 0.0
    %220 = vmatpush1.msra.mxu0 0.0
    %221 = vmatprep.subr.mxu0 0.0
    %222 = vmatpush1.msra.mxu0 0.0
    %223 = vmatprep.subr.mxu0 0.0
    %224 = vmatpush1.msra.mxu0 0.0
    %225 = vmatprep.subr.mxu0 0.0
    %226 = vmatpush1.msra.mxu0 0.0
    %227 = vmatprep.subr.mxu0 0.0
    %228 = vmatpush1.msra.mxu0 0.0
    %229 = vmatprep.subr.mxu0 0.0
    %230 = vmatpush1.msra.mxu0 0.0
    %231 = vmatprep.subr.mxu0 0.0
    %232 = vmatpush1.msra.mxu0 0.0
    %233 = vmatprep.subr.mxu0 0.0
    %234 = vmatpush1.msra.mxu0 0.0
    %235 = vmatprep.subr.mxu0 0.0
    %236 = vmatpush1.msra.mxu0 0.0
    %237 = vmatprep.subr.mxu0 0.0
    %238 = vmatpush1.msra.mxu0 0.0
    %239 = vmatprep.subr.mxu0 0.0
    %240 = vmatpush1.msra.mxu0 0.0
    %241 = vmatprep.subr.mxu0 0.0
    %242 = vmatpush1.msra.mxu0 0.0
    %243 = vmatprep.subr.mxu0 0.0
    %244 = vmatpush1.msra.mxu0 0.0
    %245 = vmatprep.subr.mxu0 0.0
    %246 = vmatpush1.msra.mxu0 0.0
    %247 = vmatprep.subr.mxu0 0.0
    %248 = vmatpush1.msra.mxu0 0.0
    %249 = vmatprep.subr.mxu0 0.0
    %250 = vmatpush1.msra.mxu0 0.0
    %251 = vmatprep.subr.mxu0 0.0
    %252 = vmatpush1.msra.mxu0 0.0
    %253 = vmatprep.subr.mxu0 0.0
    %254 = vmatpush1.msra.mxu0 0.0
    %255 = vmatprep.subr.mxu0 0.0
    %256 = vmatpush1.msra.mxu0 0.0
    %257 = vmatprep.subr.mxu0 0.0
    %258 = vmatpush1.msra.mxu0 0.0
    %259 = vmatprep.subr.mxu0 0.0
    %260 = vmatpush1.msra.mxu0 0.0
    %261 = vmatprep.subr.mxu0 0.0
    %262 = vmatpush1.msra.mxu0 0.0
    %263 = vmatprep.subr.mxu0 0.0
    %264 = vmatpush1.msra.mxu0 0.0
    %265 = vmatprep.mubr.f32.mxu0 0.0
    %266 = vmatmul.mubr.f32.gmra.mrb[0].mxu0 %v190
    %v267 = vpop.f32.mrb[0].mxu0
    %v268 = vadd.f32 0.0, %v267
    %v269 = vpop.f32.mrb[0].mxu0
    %270 = vmatprep.mubr.f32.mxu0 0.0
    %271 = vmatmul.mubr.f32.gmra.mrb[0].mxu0 %v193
    %v272 = vpop.f32.mrb[0].mxu0
    %v273 = vadd.f32 0.0, %v272
    %v274 = vpop.f32.mrb[0].mxu0
    %275 = vmatprep.mubr.f32.mxu0 0.0
    %276 = vmatmul.mubr.f32.gmra.mrb[0].mxu0 %v196
    %v277 = vpop.f32.mrb[0].mxu0
    %v278 = vadd.f32 0.0, %v277
    %v279 = vpop.f32.mrb[0].mxu0
    %280 = vmatprep.mubr.f32.mxu0 0.0
    %281 = vmatmul.mubr.f32.gmra.mrb[0].mxu0 %v199
    %v282 = vpop.f32.mrb[0].mxu0
    %v283 = vadd.f32 0.0, %v282
    %v284 = vpop.f32.mrb[0].mxu0
    %285 = vdwg.mxu0
    %v286 = vld [vmem:[%s5] sm:$0xff]
    %v287 = vunpack.c.0.s8 %v286
    %v288 = vunpack.c.1.s8 %v286
    %v289 = vunpack.c.2.s8 %v286
    %v290 = vunpack.c.3.s8 %v286
    %v291 = vcvt.s32.f32 %v287
    %v292 = vcvt.s32.f32 %v288
    %v293 = vcvt.s32.f32 %v289
    %v294 = vcvt.s32.f32 %v290
    %vm295 = vcmp.gt.f32.partialorder %v291, 0.5
    %vm296 = vcmp.gt.f32.partialorder %v292, 0.5
    %vm297 = vcmp.gt.f32.partialorder %v293, 0.5
    %vm298 = vcmp.gt.f32.partialorder %v294, 0.5
    %300 = vset.pattern.permute.xlu0 0
    %301 = vperm.xlu0 %300, %v268
    %v302 = vpop.permute.xlu0 %301
    %305 = vset.pattern.permute.xlu0 0
    %306 = vperm.xlu0 %305, %v273
    %v307 = vpop.permute.xlu0 %306
    %310 = vset.pattern.permute.xlu0 0
    %311 = vperm.xlu0 %310, %v278
    %v312 = vpop.permute.xlu0 %311
    %315 = vset.pattern.permute.xlu0 0
    %316 = vperm.xlu0 %315, %v283
    %v317 = vpop.permute.xlu0 %316
    %v319 = vlaneseq
    %v320 = vshrl.u32 %v319, 7
    %v321 = vsub.s32 0, %v320
    %v322 = vrot.slane %v180, %v321
    %v323 = vadd.f32 %v302, %v322
    %v324 = vadd.f32 %v307, %v322
    %v325 = vadd.f32 %v312, %v322
    %v326 = vadd.f32 %v317, %v322
    %vm327 = vcmp.ge.f32.partialorder %v323, 0.0
    %vm328 = vcmp.ge.f32.partialorder %v324, 0.0
    %vm329 = vcmp.ge.f32.partialorder %v325, 0.0
    %vm330 = vcmp.ge.f32.partialorder %v326, 0.0
    %v331 = vmul.f32 %v323, 0.2
    %v332 = vmul.f32 %v324, 0.2
    %v333 = vmul.f32 %v325, 0.2
    %v334 = vmul.f32 %v326, 0.2
    %v335 = vsel %vm327, %v323, %v331
    %v336 = vsel %vm328, %v324, %v332
    %v337 = vsel %vm329, %v325, %v333
    %v338 = vsel %vm330, %v326, %v334
    %v339 = vsel %vm295, %v335, -1e+30
    %v340 = vsel %vm296, %v336, -1e+30
    %v341 = vsel %vm297, %v337, -1e+30
    %v342 = vsel %vm298, %v338, -1e+30
    %vm343 = vcmask 261120
    %v344 = vsel %vm343, %v339, -inf
    %345 = vmax.xlane.f32.xlu0 %v344
    %v346 = vpop.xlane.xlu0 %345
    %v347 = vsel %vm343, %v340, -inf
    %348 = vmax.xlane.f32.xlu0 %v347
    %v349 = vpop.xlane.xlu0 %348
    %v350 = vsel %vm343, %v341, -inf
    %351 = vmax.xlane.f32.xlu0 %v350
    %v352 = vpop.xlane.xlu0 %351
    %v353 = vsel %vm343, %v342, -inf
    %354 = vmax.xlane.f32.xlu0 %v353
    %v355 = vpop.xlane.xlu0 %354
    %v356 = vsub.f32 %v339, %v346
    %v357 = vsub.f32 %v340, %v349
    %v358 = vsub.f32 %v341, %v352
    %v359 = vsub.f32 %v342, %v355
    %v360 = vmul.f32 %v356, 1.442695
    %v361 = vpow.pop %v360
    %v362 = vmul.f32 %v357, 1.442695
    %v363 = vpow.pop %v362
    %v364 = vmul.f32 %v358, 1.442695
    %v365 = vpow.pop %v364
    %v366 = vmul.f32 %v359, 1.442695
    %v367 = vpow.pop %v366
    %v368 = vsel %vm295, %v361, 0.0
    %v369 = vsel %vm296, %v363, 0.0
    %v370 = vsel %vm297, %v365, 0.0
    %v371 = vsel %vm298, %v367, 0.0
    %v372 = vsel %vm343, %v368, 0.0
    %373 = vadd.xlane.f32.xlu0 %v372
    %v374 = vpop.xlane.xlu0 %373
    %v375 = vsel %vm343, %v369, 0.0
    %376 = vadd.xlane.f32.xlu0 %v375
    %v377 = vpop.xlane.xlu0 %376
    %v378 = vsel %vm343, %v370, 0.0
    %379 = vadd.xlane.f32.xlu0 %v378
    %v380 = vpop.xlane.xlu0 %379
    %v381 = vsel %vm343, %v371, 0.0
    %382 = vadd.xlane.f32.xlu0 %v381
    %v383 = vpop.xlane.xlu0 %382
    %v384 = vmax.f32 %v374, 1e-16
    %v385 = vmax.f32 %v377, 1e-16
    %v386 = vmax.f32 %v380, 1e-16
    %v387 = vmax.f32 %v383, 1e-16
    %v388 = vrcp.pop %v384
    %v389 = vrcp.pop %v385
    %v390 = vrcp.pop %v386
    %v391 = vrcp.pop %v387
    %v392 = vpack.c.bf16 %v369, %v368
    %v393 = vpack.c.bf16 %v371, %v370
    %v395 = vsel %vm343, %v392, 0
    %v398 = vsel %vm343, %v393, 0
    %400 = vmatprep.subr.bf16.mxu0 0
    %401 = vmatpush1.bf16.msra.mxu0 %v95
    %402 = vmatprep.subr.bf16.mxu0 0
    %403 = vmatpush1.bf16.msra.mxu0 %v96
    %404 = vmatprep.subr.bf16.mxu0 0
    %405 = vmatpush1.bf16.msra.mxu0 0
    %406 = vmatprep.subr.bf16.mxu0 0
    %407 = vmatpush1.bf16.msra.mxu0 0
    %408 = vmatprep.subr.bf16.mxu0 0
    %409 = vmatpush1.bf16.msra.mxu0 0
    %410 = vmatprep.subr.bf16.mxu0 0
    %411 = vmatpush1.bf16.msra.mxu0 0
    %412 = vmatprep.subr.bf16.mxu0 0
    %413 = vmatpush1.bf16.msra.mxu0 0
    %414 = vmatprep.subr.bf16.mxu0 0
    %415 = vmatpush1.bf16.msra.mxu0 0
    %416 = vmatprep.subr.bf16.mxu0 0
    %417 = vmatpush1.bf16.msra.mxu0 0
    %418 = vmatprep.subr.bf16.mxu0 0
    %419 = vmatpush1.bf16.msra.mxu0 0
    %420 = vmatprep.subr.bf16.mxu0 0
    %421 = vmatpush1.bf16.msra.mxu0 0
    %422 = vmatprep.subr.bf16.mxu0 0
    %423 = vmatpush1.bf16.msra.mxu0 0
    %424 = vmatprep.subr.bf16.mxu0 0
    %425 = vmatpush1.bf16.msra.mxu0 0
    %426 = vmatprep.subr.bf16.mxu0 0
    %427 = vmatpush1.bf16.msra.mxu0 0
    %428 = vmatprep.subr.bf16.mxu0 0
    %429 = vmatpush1.bf16.msra.mxu0 0
    %430 = vmatprep.subr.bf16.mxu0 0
    %431 = vmatpush1.bf16.msra.mxu0 0
    %432 = vmatprep.mubr.bf16.mxu0 0
    %433 = vmatmul.mubr.bf16.gmra.mrb[0].mxu0 %v395
    %v434 = vpop.f32.mrb[0].mxu0
    %v435 = vadd.f32 0.0, %v434
    %v436 = vpop.f32.mrb[0].mxu0
    %v437 = vpop.f32.mrb[0].mxu0
    %v438 = vadd.f32 0.0, %v437
    %v439 = vpop.f32.mrb[0].mxu0
    %440 = vmatprep.mubr.bf16.mxu0 0
    %441 = vmatmul.mubr.bf16.gmra.mrb[0].mxu0 %v398
    %v442 = vpop.f32.mrb[0].mxu0
    %v443 = vadd.f32 0.0, %v442
    %v444 = vpop.f32.mrb[0].mxu0
    %v445 = vpop.f32.mrb[0].mxu0
    %v446 = vadd.f32 0.0, %v445
    %v447 = vpop.f32.mrb[0].mxu0
    %448 = vdwg.mxu0
    %v449 = vmul.f32 %v435, %v388
    %v450 = vmul.f32 %v438, %v389
    %v451 = vmul.f32 %v443, %v390
    %v452 = vmul.f32 %v446, %v391
    %453 = vset.pattern.permute.xlu0 1
    %454 = vperm.xlu0 %453, %v268
    %v455 = vpop.permute.xlu0 %454
    %457 = vset.pattern.permute.xlu0 1
    %458 = vperm.xlu0 %457, %v273
    %v459 = vpop.permute.xlu0 %458
    %461 = vset.pattern.permute.xlu0 1
    %462 = vperm.xlu0 %461, %v278
    %v463 = vpop.permute.xlu0 %462
    %465 = vset.pattern.permute.xlu0 1
    %466 = vperm.xlu0 %465, %v283
    %v467 = vpop.permute.xlu0 %466
    %v469 = vlaneseq
    %v470 = vshrl.u32 %v469, 7
    %v471 = vsub.s32 1, %v470
    %v472 = vrot.slane %v180, %v471
    %v473 = vadd.f32 %v455, %v472
    %v474 = vadd.f32 %v459, %v472
    %v475 = vadd.f32 %v463, %v472
    %v476 = vadd.f32 %v467, %v472
    %vm477 = vcmp.ge.f32.partialorder %v473, 0.0
    %vm478 = vcmp.ge.f32.partialorder %v474, 0.0
    %vm479 = vcmp.ge.f32.partialorder %v475, 0.0
    %vm480 = vcmp.ge.f32.partialorder %v476, 0.0
    %v481 = vmul.f32 %v473, 0.2
    %v482 = vmul.f32 %v474, 0.2
    %v483 = vmul.f32 %v475, 0.2
    %v484 = vmul.f32 %v476, 0.2
    %v485 = vsel %vm477, %v473, %v481
    %v486 = vsel %vm478, %v474, %v482
    %v487 = vsel %vm479, %v475, %v483
    %v488 = vsel %vm480, %v476, %v484
    %v489 = vsel %vm295, %v485, -1e+30
    %v490 = vsel %vm296, %v486, -1e+30
    %v491 = vsel %vm297, %v487, -1e+30
    %v492 = vsel %vm298, %v488, -1e+30
    %v493 = vsel %vm343, %v489, -inf
    %494 = vmax.xlane.f32.xlu0 %v493
    %v495 = vpop.xlane.xlu0 %494
    %v496 = vsel %vm343, %v490, -inf
    %497 = vmax.xlane.f32.xlu0 %v496
    %v498 = vpop.xlane.xlu0 %497
    %v499 = vsel %vm343, %v491, -inf
    %500 = vmax.xlane.f32.xlu0 %v499
    %v501 = vpop.xlane.xlu0 %500
    %v502 = vsel %vm343, %v492, -inf
    %503 = vmax.xlane.f32.xlu0 %v502
    %v504 = vpop.xlane.xlu0 %503
    %v505 = vsub.f32 %v489, %v495
    %v506 = vsub.f32 %v490, %v498
    %v507 = vsub.f32 %v491, %v501
    %v508 = vsub.f32 %v492, %v504
    %v509 = vmul.f32 %v505, 1.442695
    %v510 = vpow.pop %v509
    %v511 = vmul.f32 %v506, 1.442695
    %v512 = vpow.pop %v511
    %v513 = vmul.f32 %v507, 1.442695
    %v514 = vpow.pop %v513
    %v515 = vmul.f32 %v508, 1.442695
    %v516 = vpow.pop %v515
    %v517 = vsel %vm295, %v510, 0.0
    %v518 = vsel %vm296, %v512, 0.0
    %v519 = vsel %vm297, %v514, 0.0
    %v520 = vsel %vm298, %v516, 0.0
    %v521 = vsel %vm343, %v517, 0.0
    %522 = vadd.xlane.f32.xlu0 %v521
    %v523 = vpop.xlane.xlu0 %522
    %v524 = vsel %vm343, %v518, 0.0
    %525 = vadd.xlane.f32.xlu0 %v524
    %v526 = vpop.xlane.xlu0 %525
    %v527 = vsel %vm343, %v519, 0.0
    %528 = vadd.xlane.f32.xlu0 %v527
    %v529 = vpop.xlane.xlu0 %528
    %v530 = vsel %vm343, %v520, 0.0
    %531 = vadd.xlane.f32.xlu0 %v530
    %v532 = vpop.xlane.xlu0 %531
    %v533 = vmax.f32 %v523, 1e-16
    %v534 = vmax.f32 %v526, 1e-16
    %v535 = vmax.f32 %v529, 1e-16
    %v536 = vmax.f32 %v532, 1e-16
    %v537 = vrcp.pop %v533
    %v538 = vrcp.pop %v534
    %v539 = vrcp.pop %v535
    %v540 = vrcp.pop %v536
    %v541 = vpack.c.bf16 %v518, %v517
    %v542 = vpack.c.bf16 %v520, %v519
    %545 = vrot.lane.b32.xlu0 %v95, 96
    %v546 = vpop.permute.xlu0 %545
    %547 = vrot.lane.b32.xlu0 %v96, 96
    %v548 = vpop.permute.xlu0 %547
    %v552 = vsel %vm343, %v541, 0
    %v555 = vsel %vm343, %v542, 0
    %557 = vmatprep.subr.bf16.mxu0 0
    %558 = vmatpush1.bf16.msra.mxu0 %v546
    %559 = vmatprep.subr.bf16.mxu0 0
    %560 = vmatpush1.bf16.msra.mxu0 %v548
    %561 = vmatprep.subr.bf16.mxu0 0
    %562 = vmatpush1.bf16.msra.mxu0 0
    %563 = vmatprep.subr.bf16.mxu0 0
    %564 = vmatpush1.bf16.msra.mxu0 0
    %565 = vmatprep.subr.bf16.mxu0 0
    %566 = vmatpush1.bf16.msra.mxu0 0
    %567 = vmatprep.subr.bf16.mxu0 0
    %568 = vmatpush1.bf16.msra.mxu0 0
    %569 = vmatprep.subr.bf16.mxu0 0
    %570 = vmatpush1.bf16.msra.mxu0 0
    %571 = vmatprep.subr.bf16.mxu0 0
    %572 = vmatpush1.bf16.msra.mxu0 0
    %573 = vmatprep.subr.bf16.mxu0 0
    %574 = vmatpush1.bf16.msra.mxu0 0
    %575 = vmatprep.subr.bf16.mxu0 0
    %576 = vmatpush1.bf16.msra.mxu0 0
    %577 = vmatprep.subr.bf16.mxu0 0
    %578 = vmatpush1.bf16.msra.mxu0 0
    %579 = vmatprep.subr.bf16.mxu0 0
    %580 = vmatpush1.bf16.msra.mxu0 0
    %581 = vmatprep.subr.bf16.mxu0 0
    %582 = vmatpush1.bf16.msra.mxu0 0
    %583 = vmatprep.subr.bf16.mxu0 0
    %584 = vmatpush1.bf16.msra.mxu0 0
    %585 = vmatprep.subr.bf16.mxu0 0
    %586 = vmatpush1.bf16.msra.mxu0 0
    %587 = vmatprep.subr.bf16.mxu0 0
    %588 = vmatpush1.bf16.msra.mxu0 0
    %589 = vmatprep.mubr.bf16.mxu0 0
    %590 = vmatmul.mubr.bf16.gmra.mrb[0].mxu0 %v552
    %v591 = vpop.f32.mrb[0].mxu0
    %v592 = vadd.f32 0.0, %v591
    %v593 = vpop.f32.mrb[0].mxu0
    %v594 = vpop.f32.mrb[0].mxu0
    %v595 = vadd.f32 0.0, %v594
    %v596 = vpop.f32.mrb[0].mxu0
    %597 = vmatprep.mubr.bf16.mxu0 0
    %598 = vmatmul.mubr.bf16.gmra.mrb[0].mxu0 %v555
    %v599 = vpop.f32.mrb[0].mxu0
    %v600 = vadd.f32 0.0, %v599
    %v601 = vpop.f32.mrb[0].mxu0
    %v602 = vpop.f32.mrb[0].mxu0
    %v603 = vadd.f32 0.0, %v602
    %v604 = vpop.f32.mrb[0].mxu0
    %605 = vdwg.mxu0
    %v606 = vmul.f32 %v592, %v537
    %v607 = vmul.f32 %v595, %v538
    %v608 = vmul.f32 %v600, %v539
    %v609 = vmul.f32 %v603, %v540
    %610 = vset.pattern.permute.xlu0 2
    %611 = vperm.xlu0 %610, %v268
    %v612 = vpop.permute.xlu0 %611
    %614 = vset.pattern.permute.xlu0 2
    %615 = vperm.xlu0 %614, %v273
    %v616 = vpop.permute.xlu0 %615
    %618 = vset.pattern.permute.xlu0 2
    %619 = vperm.xlu0 %618, %v278
    %v620 = vpop.permute.xlu0 %619
    %622 = vset.pattern.permute.xlu0 2
    %623 = vperm.xlu0 %622, %v283
    %v624 = vpop.permute.xlu0 %623
    %v626 = vlaneseq
    %v627 = vshrl.u32 %v626, 7
    %v628 = vsub.s32 2, %v627
    %v629 = vrot.slane %v180, %v628
    %v630 = vadd.f32 %v612, %v629
    %v631 = vadd.f32 %v616, %v629
    %v632 = vadd.f32 %v620, %v629
    %v633 = vadd.f32 %v624, %v629
    %vm634 = vcmp.ge.f32.partialorder %v630, 0.0
    %vm635 = vcmp.ge.f32.partialorder %v631, 0.0
    %vm636 = vcmp.ge.f32.partialorder %v632, 0.0
    %vm637 = vcmp.ge.f32.partialorder %v633, 0.0
    %v638 = vmul.f32 %v630, 0.2
    %v639 = vmul.f32 %v631, 0.2
    %v640 = vmul.f32 %v632, 0.2
    %v641 = vmul.f32 %v633, 0.2
    %v642 = vsel %vm634, %v630, %v638
    %v643 = vsel %vm635, %v631, %v639
    %v644 = vsel %vm636, %v632, %v640
    %v645 = vsel %vm637, %v633, %v641
    %v646 = vsel %vm295, %v642, -1e+30
    %v647 = vsel %vm296, %v643, -1e+30
    %v648 = vsel %vm297, %v644, -1e+30
    %v649 = vsel %vm298, %v645, -1e+30
    %v650 = vsel %vm343, %v646, -inf
    %651 = vmax.xlane.f32.xlu0 %v650
    %v652 = vpop.xlane.xlu0 %651
    %v653 = vsel %vm343, %v647, -inf
    %654 = vmax.xlane.f32.xlu0 %v653
    %v655 = vpop.xlane.xlu0 %654
    %v656 = vsel %vm343, %v648, -inf
    %657 = vmax.xlane.f32.xlu0 %v656
    %v658 = vpop.xlane.xlu0 %657
    %v659 = vsel %vm343, %v649, -inf
    %660 = vmax.xlane.f32.xlu0 %v659
    %v661 = vpop.xlane.xlu0 %660
    %v662 = vsub.f32 %v646, %v652
    %v663 = vsub.f32 %v647, %v655
    %v664 = vsub.f32 %v648, %v658
    %v665 = vsub.f32 %v649, %v661
    %v666 = vmul.f32 %v662, 1.442695
    %v667 = vpow.pop %v666
    %v668 = vmul.f32 %v663, 1.442695
    %v669 = vpow.pop %v668
    %v670 = vmul.f32 %v664, 1.442695
    %v671 = vpow.pop %v670
    %v672 = vmul.f32 %v665, 1.442695
    %v673 = vpow.pop %v672
    %v674 = vsel %vm295, %v667, 0.0
    %v675 = vsel %vm296, %v669, 0.0
    %v676 = vsel %vm297, %v671, 0.0
    %v677 = vsel %vm298, %v673, 0.0
    %v678 = vsel %vm343, %v674, 0.0
    %679 = vadd.xlane.f32.xlu0 %v678
    %v680 = vpop.xlane.xlu0 %679
    %v681 = vsel %vm343, %v675, 0.0
    %682 = vadd.xlane.f32.xlu0 %v681
    %v683 = vpop.xlane.xlu0 %682
    %v684 = vsel %vm343, %v676, 0.0
    %685 = vadd.xlane.f32.xlu0 %v684
    %v686 = vpop.xlane.xlu0 %685
    %v687 = vsel %vm343, %v677, 0.0
    %688 = vadd.xlane.f32.xlu0 %v687
    %v689 = vpop.xlane.xlu0 %688
    %v690 = vmax.f32 %v680, 1e-16
    %v691 = vmax.f32 %v683, 1e-16
    %v692 = vmax.f32 %v686, 1e-16
    %v693 = vmax.f32 %v689, 1e-16
    %v694 = vrcp.pop %v690
    %v695 = vrcp.pop %v691
    %v696 = vrcp.pop %v692
    %v697 = vrcp.pop %v693
    %v698 = vpack.c.bf16 %v675, %v674
    %v699 = vpack.c.bf16 %v677, %v676
    %700 = vrot.lane.b32.xlu0 %v95, 64
    %v701 = vpop.permute.xlu0 %700
    %702 = vrot.lane.b32.xlu0 %v96, 64
    %v703 = vpop.permute.xlu0 %702
    %v707 = vsel %vm343, %v698, 0
    %v710 = vsel %vm343, %v699, 0
    %712 = vmatprep.subr.bf16.mxu0 0
    %713 = vmatpush1.bf16.msra.mxu0 %v701
    %714 = vmatprep.subr.bf16.mxu0 0
    %715 = vmatpush1.bf16.msra.mxu0 %v703
    %716 = vmatprep.subr.bf16.mxu0 0
    %717 = vmatpush1.bf16.msra.mxu0 0
    %718 = vmatprep.subr.bf16.mxu0 0
    %719 = vmatpush1.bf16.msra.mxu0 0
    %720 = vmatprep.subr.bf16.mxu0 0
    %721 = vmatpush1.bf16.msra.mxu0 0
    %722 = vmatprep.subr.bf16.mxu0 0
    %723 = vmatpush1.bf16.msra.mxu0 0
    %724 = vmatprep.subr.bf16.mxu0 0
    %725 = vmatpush1.bf16.msra.mxu0 0
    %726 = vmatprep.subr.bf16.mxu0 0
    %727 = vmatpush1.bf16.msra.mxu0 0
    %728 = vmatprep.subr.bf16.mxu0 0
    %729 = vmatpush1.bf16.msra.mxu0 0
    %730 = vmatprep.subr.bf16.mxu0 0
    %731 = vmatpush1.bf16.msra.mxu0 0
    %732 = vmatprep.subr.bf16.mxu0 0
    %733 = vmatpush1.bf16.msra.mxu0 0
    %734 = vmatprep.subr.bf16.mxu0 0
    %735 = vmatpush1.bf16.msra.mxu0 0
    %736 = vmatprep.subr.bf16.mxu0 0
    %737 = vmatpush1.bf16.msra.mxu0 0
    %738 = vmatprep.subr.bf16.mxu0 0
    %739 = vmatpush1.bf16.msra.mxu0 0
    %740 = vmatprep.subr.bf16.mxu0 0
    %741 = vmatpush1.bf16.msra.mxu0 0
    %742 = vmatprep.subr.bf16.mxu0 0
    %743 = vmatpush1.bf16.msra.mxu0 0
    %744 = vmatprep.mubr.bf16.mxu0 0
    %745 = vmatmul.mubr.bf16.gmra.mrb[0].mxu0 %v707
    %v746 = vpop.f32.mrb[0].mxu0
    %v747 = vadd.f32 0.0, %v746
    %v748 = vpop.f32.mrb[0].mxu0
    %v749 = vpop.f32.mrb[0].mxu0
    %v750 = vadd.f32 0.0, %v749
    %v751 = vpop.f32.mrb[0].mxu0
    %752 = vmatprep.mubr.bf16.mxu0 0
    %753 = vmatmul.mubr.bf16.gmra.mrb[0].mxu0 %v710
    %v754 = vpop.f32.mrb[0].mxu0
    %v755 = vadd.f32 0.0, %v754
    %v756 = vpop.f32.mrb[0].mxu0
    %v757 = vpop.f32.mrb[0].mxu0
    %v758 = vadd.f32 0.0, %v757
    %v759 = vpop.f32.mrb[0].mxu0
    %760 = vdwg.mxu0
    %v761 = vmul.f32 %v747, %v694
    %v762 = vmul.f32 %v750, %v695
    %v763 = vmul.f32 %v755, %v696
    %v764 = vmul.f32 %v758, %v697
    %765 = vset.pattern.permute.xlu0 3
    %766 = vperm.xlu0 %765, %v268
    %v767 = vpop.permute.xlu0 %766
    %769 = vset.pattern.permute.xlu0 3
    %770 = vperm.xlu0 %769, %v273
    %v771 = vpop.permute.xlu0 %770
    %773 = vset.pattern.permute.xlu0 3
    %774 = vperm.xlu0 %773, %v278
    %v775 = vpop.permute.xlu0 %774
    %777 = vset.pattern.permute.xlu0 3
    %778 = vperm.xlu0 %777, %v283
    %v779 = vpop.permute.xlu0 %778
    %v781 = vlaneseq
    %v782 = vshrl.u32 %v781, 7
    %v783 = vsub.s32 3, %v782
    %v784 = vrot.slane %v180, %v783
    %v785 = vadd.f32 %v767, %v784
    %v786 = vadd.f32 %v771, %v784
    %v787 = vadd.f32 %v775, %v784
    %v788 = vadd.f32 %v779, %v784
    %vm789 = vcmp.ge.f32.partialorder %v785, 0.0
    %vm790 = vcmp.ge.f32.partialorder %v786, 0.0
    %vm791 = vcmp.ge.f32.partialorder %v787, 0.0
    %vm792 = vcmp.ge.f32.partialorder %v788, 0.0
    %v793 = vmul.f32 %v785, 0.2
    %v794 = vmul.f32 %v786, 0.2
    %v795 = vmul.f32 %v787, 0.2
    %v796 = vmul.f32 %v788, 0.2
    %v797 = vsel %vm789, %v785, %v793
    %v798 = vsel %vm790, %v786, %v794
    %v799 = vsel %vm791, %v787, %v795
    %v800 = vsel %vm792, %v788, %v796
    %v801 = vsel %vm295, %v797, -1e+30
    %v802 = vsel %vm296, %v798, -1e+30
    %v803 = vsel %vm297, %v799, -1e+30
    %v804 = vsel %vm298, %v800, -1e+30
    %v805 = vsel %vm343, %v801, -inf
    %806 = vmax.xlane.f32.xlu0 %v805
    %v807 = vpop.xlane.xlu0 %806
    %v808 = vsel %vm343, %v802, -inf
    %809 = vmax.xlane.f32.xlu0 %v808
    %v810 = vpop.xlane.xlu0 %809
    %v811 = vsel %vm343, %v803, -inf
    %812 = vmax.xlane.f32.xlu0 %v811
    %v813 = vpop.xlane.xlu0 %812
    %v814 = vsel %vm343, %v804, -inf
    %815 = vmax.xlane.f32.xlu0 %v814
    %v816 = vpop.xlane.xlu0 %815
    %v817 = vsub.f32 %v801, %v807
    %v818 = vsub.f32 %v802, %v810
    %v819 = vsub.f32 %v803, %v813
    %v820 = vsub.f32 %v804, %v816
    %v821 = vmul.f32 %v817, 1.442695
    %v822 = vpow.pop %v821
    %v823 = vmul.f32 %v818, 1.442695
    %v824 = vpow.pop %v823
    %v825 = vmul.f32 %v819, 1.442695
    %v826 = vpow.pop %v825
    %v827 = vmul.f32 %v820, 1.442695
    %v828 = vpow.pop %v827
    %v829 = vsel %vm295, %v822, 0.0
    %v830 = vsel %vm296, %v824, 0.0
    %v831 = vsel %vm297, %v826, 0.0
    %v832 = vsel %vm298, %v828, 0.0
    %v833 = vsel %vm343, %v829, 0.0
    %834 = vadd.xlane.f32.xlu0 %v833
    %v835 = vpop.xlane.xlu0 %834
    %v836 = vsel %vm343, %v830, 0.0
    %837 = vadd.xlane.f32.xlu0 %v836
    %v838 = vpop.xlane.xlu0 %837
    %v839 = vsel %vm343, %v831, 0.0
    %840 = vadd.xlane.f32.xlu0 %v839
    %v841 = vpop.xlane.xlu0 %840
    %v842 = vsel %vm343, %v832, 0.0
    %843 = vadd.xlane.f32.xlu0 %v842
    %v844 = vpop.xlane.xlu0 %843
    %v845 = vmax.f32 %v835, 1e-16
    %v846 = vmax.f32 %v838, 1e-16
    %v847 = vmax.f32 %v841, 1e-16
    %v848 = vmax.f32 %v844, 1e-16
    %v849 = vrcp.pop %v845
    %v850 = vrcp.pop %v846
    %v851 = vrcp.pop %v847
    %v852 = vrcp.pop %v848
    %v853 = vpack.c.bf16 %v830, %v829
    %v854 = vpack.c.bf16 %v832, %v831
    %855 = vrot.lane.b32.xlu0 %v95, 32
    %v856 = vpop.permute.xlu0 %855
    %857 = vrot.lane.b32.xlu0 %v96, 32
    %v858 = vpop.permute.xlu0 %857
    %v862 = vsel %vm343, %v853, 0
    %v865 = vsel %vm343, %v854, 0
    %867 = vmatprep.subr.bf16.mxu0 0
    %868 = vmatpush1.bf16.msra.mxu0 %v856
    %869 = vmatprep.subr.bf16.mxu0 0
    %870 = vmatpush1.bf16.msra.mxu0 %v858
    %871 = vmatprep.subr.bf16.mxu0 0
    %872 = vmatpush1.bf16.msra.mxu0 0
    %873 = vmatprep.subr.bf16.mxu0 0
    %874 = vmatpush1.bf16.msra.mxu0 0
    %875 = vmatprep.subr.bf16.mxu0 0
    %876 = vmatpush1.bf16.msra.mxu0 0
    %877 = vmatprep.subr.bf16.mxu0 0
    %878 = vmatpush1.bf16.msra.mxu0 0
    %879 = vmatprep.subr.bf16.mxu0 0
    %880 = vmatpush1.bf16.msra.mxu0 0
    %881 = vmatprep.subr.bf16.mxu0 0
    %882 = vmatpush1.bf16.msra.mxu0 0
    %883 = vmatprep.subr.bf16.mxu0 0
    %884 = vmatpush1.bf16.msra.mxu0 0
    %885 = vmatprep.subr.bf16.mxu0 0
    %886 = vmatpush1.bf16.msra.mxu0 0
    %887 = vmatprep.subr.bf16.mxu0 0
    %888 = vmatpush1.bf16.msra.mxu0 0
    %889 = vmatprep.subr.bf16.mxu0 0
    %890 = vmatpush1.bf16.msra.mxu0 0
    %891 = vmatprep.subr.bf16.mxu0 0
    %892 = vmatpush1.bf16.msra.mxu0 0
    %893 = vmatprep.subr.bf16.mxu0 0
    %894 = vmatpush1.bf16.msra.mxu0 0
    %895 = vmatprep.subr.bf16.mxu0 0
    %896 = vmatpush1.bf16.msra.mxu0 0
    %897 = vmatprep.subr.bf16.mxu0 0
    %898 = vmatpush1.bf16.msra.mxu0 0
    %899 = vmatprep.mubr.bf16.mxu0 0
    %900 = vmatmul.mubr.bf16.gmra.mrb[0].mxu0 %v862
    %v901 = vpop.f32.mrb[0].mxu0
    %v902 = vadd.f32 0.0, %v901
    %v903 = vpop.f32.mrb[0].mxu0
    %v904 = vpop.f32.mrb[0].mxu0
    %v905 = vadd.f32 0.0, %v904
    %v906 = vpop.f32.mrb[0].mxu0
    %907 = vmatprep.mubr.bf16.mxu0 0
    %908 = vmatmul.mubr.bf16.gmra.mrb[0].mxu0 %v865
    %v909 = vpop.f32.mrb[0].mxu0
    %v910 = vadd.f32 0.0, %v909
    %v911 = vpop.f32.mrb[0].mxu0
    %v912 = vpop.f32.mrb[0].mxu0
    %v913 = vadd.f32 0.0, %v912
    %v914 = vpop.f32.mrb[0].mxu0
    %915 = vdwg.mxu0
    %v916 = vmul.f32 %v902, %v849
    %v917 = vmul.f32 %v905, %v850
    %v918 = vmul.f32 %v910, %v851
    %v919 = vmul.f32 %v913, %v852
    %924 = vrot.lane.b32.xlu0 %v606, 32
    %v925 = vpop.permute.xlu0 %924
    %926 = vrot.lane.b32.xlu0 %v607, 32
    %v927 = vpop.permute.xlu0 %926
    %928 = vrot.lane.b32.xlu0 %v608, 32
    %v929 = vpop.permute.xlu0 %928
    %930 = vrot.lane.b32.xlu0 %v609, 32
    %v931 = vpop.permute.xlu0 %930
    %940 = vrot.lane.b32.xlu0 %v761, 64
    %v941 = vpop.permute.xlu0 %940
    %942 = vrot.lane.b32.xlu0 %v762, 64
    %v943 = vpop.permute.xlu0 %942
    %944 = vrot.lane.b32.xlu0 %v763, 64
    %v945 = vpop.permute.xlu0 %944
    %946 = vrot.lane.b32.xlu0 %v764, 64
    %v947 = vpop.permute.xlu0 %946
    %956 = vrot.lane.b32.xlu0 %v916, 96
    %v957 = vpop.permute.xlu0 %956
    %958 = vrot.lane.b32.xlu0 %v917, 96
    %v959 = vpop.permute.xlu0 %958
    %960 = vrot.lane.b32.xlu0 %v918, 96
    %v961 = vpop.permute.xlu0 %960
    %962 = vrot.lane.b32.xlu0 %v919, 96
    %v963 = vpop.permute.xlu0 %962
    %v968 = vsel %vm343, %v449, %v925
    %v969 = vsel %vm343, %v450, %v927
    %v970 = vsel %vm343, %v451, %v929
    %v971 = vsel %vm343, %v452, %v931
    %vm972 = vcmask 523264
    %v973 = vsel %vm972, %v968, %v941
    %v974 = vsel %vm972, %v969, %v943
    %v975 = vsel %vm972, %v970, %v945
    %v976 = vsel %vm972, %v971, %v947
    %vm977 = vcmask 785408
    %v978 = vsel %vm977, %v973, %v957
    %v979 = vsel %vm977, %v974, %v959
    %v980 = vsel %vm977, %v975, %v961
    %v981 = vsel %vm977, %v976, %v963
    %982 = vst [vmem:[#allocation2] sm:$0xff] %v978
    %983 = vst [vmem:[#allocation2 + $0x8] sm:$0xff] %v979
    %984 = vst [vmem:[#allocation2 + $0x10] sm:$0xff] %v980
    %985 = vst [vmem:[#allocation2 + $0x18] sm:$0xff] %v981
    // Predicated region
    $region26: #{tpu_custom_call.1} parent=1 // pred_check
      _
    $region27: #{tpu_custom_call.1} parent=1 // pred_check_branch
      %987 = sbr.rel (0) target = $region29
    $region28: #{tpu_custom_call.1} parent=1 // pred_region
      %s989 = ssub.s32 512, 512
      %990 = vsyncadd [#allocation3], %s989
      %s991 = sshll.u32 [#allocation2], 4
      %s992 = int_to_ptr.vmem [resolvable:$true] %s991
      %997 = dma.vmem_to_hbm [thread:$0]  %s992, 512, %s6, [#allocation3], 128, 128, 8
    $region29: #{tpu_custom_call.1} parent=1 // pred_fallthru
      _
    // Predicated region
    $region30: #{tpu_custom_call.1} parent=1 // pred_check
      _
    $region31: #{tpu_custom_call.1} parent=1 // pred_check_branch
      %999 = sbr.rel (0) target = $region33
    $region32: #{tpu_custom_call.1} parent=1 // pred_region
      %1000 = dma.done [#allocation3], 512
    $region33: #{tpu_custom_call.1} parent=1 // pred_fallthru
      _
    %1001 = vsyncpa [#allocation3], 1

</llo_original>
